<compile_context>
chip_gen: v7x
topology: tpu7x:2x2x1
jax: 0.10.0
libtpu: 0.0.40
codegen_flags: <defaults>
</compile_context>

<pallas_src>
import functools

import jax
import jax.numpy as jnp
from jax.experimental import pallas as pl
from jax.experimental.pallas import tpu as pltpu

TILE_B = 64 * 1024              # batch rows (lanes) per grid step; multiple of 128
MIN_PALLAS_BATCH = 2 * TILE_B   # below this, let XLA fuse the tiny matmuls
_VMEM_LIMIT_BYTES = 48 * 1024 * 1024  # > v5e 16 MiB scoped default, < v7x 64 MiB physical


def _mlp_fm_kernel(x_ref, w1_ref, b1_ref, w2_ref, b2_ref, o_ref):
    """Feature-major MLP tile.

    x_ref : [F, tile_b]   (batch on the lane axis)
    w1_ref: [H, F]   b1_ref: [H, 1]
    w2_ref: [O, H]   b2_ref: [O, 1]
    o_ref : [O, tile_b]
    """
    h = jnp.dot(w1_ref[...], x_ref[...], preferred_element_type=jnp.float32)
    h = jnp.maximum(h + b1_ref[...], 0.0)
    out = jnp.dot(w2_ref[...], h, preferred_element_type=jnp.float32) + b2_ref[...]
    o_ref[...] = out.astype(o_ref.dtype)


@functools.partial(jax.jit, static_argnames=("tile_b",))
def simple_model_forward_fm(x_fm, w1, b1, w2, b2, *, tile_b=TILE_B):
    """Feature-major forward: x_fm [F, B] -> [O, B]. Weights in PyTorch [out, in] layout."""
    F, B = x_fm.shape
    H = w1.shape[0]
    O = w2.shape[0]

    # Small B: use the full batch as a single (full-dim) block. Large B: fixed
    # 128-multiple tile, cdiv grid, Pallas masks the partial tail block.
    tile = B if B < tile_b else tile_b
    grid = (pl.cdiv(B, tile),)

    return pl.pallas_call(
        _mlp_fm_kernel,
        out_shape=jax.ShapeDtypeStruct((O, B), x_fm.dtype),
        grid_spec=pltpu.PrefetchScalarGridSpec(
            num_scalar_prefetch=0,
            grid=grid,
            in_specs=[
                pl.BlockSpec((F, tile), lambda i: (0, i)),   # x tile (pipelined, lane-dense)
                pl.BlockSpec((H, F), lambda i: (0, 0)),      # W1 (VMEM-resident)
                pl.BlockSpec((H, 1), lambda i: (0, 0)),      # b1
                pl.BlockSpec((O, H), lambda i: (0, 0)),      # W2
                pl.BlockSpec((O, 1), lambda i: (0, 0)),      # b2
            ],
            out_specs=pl.BlockSpec((O, tile), lambda i: (0, i)),
        ),
        compiler_params=pltpu.CompilerParams(
            dimension_semantics=("parallel",),   # batch tiles independent -> megacore on v7x
            vmem_limit_bytes=_VMEM_LIMIT_BYTES,
        ),
    )(x_fm, w1, b1, w2, b2)


def _mlp_reference(x, w1, b1, w2, b2):
    """Plain-XLA reference, PyTorch layout: relu(x @ W1.T + b1) @ W2.T + b2."""
    h = jnp.maximum(x @ w1.T + b1[:, 0], 0.0)
    return h @ w2.T + b2[:, 0]


@functools.partial(jax.jit, static_argnames=("force_pallas", "tile_b"))
def simple_model_forward(x, w1, b1, w2, b2, *, force_pallas=False, tile_b=TILE_B):
    """PyTorch-convention forward: x [B, 10] f32 -> [B, 2] f32."""
    B = x.shape[0]
    if not force_pallas and B < MIN_PALLAS_BATCH:
        return _mlp_reference(x, w1, b1, w2, b2)
    # Boundary transposes keep the caller's [B, F] convention; producers that can
    # emit x feature-major should call simple_model_forward_fm directly and skip
    # the extra HBM pass on x.
    out_fm = simple_model_forward_fm(x.T, w1, b1, w2, b2, tile_b=tile_b)
    return out_fm.T


def _init_params(key):
    """Deterministic init matching PyTorch nn.Linear(10,5)/(5,2) conventions.

    Weights kept in PyTorch's native [out_features, in_features] layout; biases
    stored as [out, 1] so they broadcast along the lane (batch) axis in-kernel.
    """
    k1, k2, k3, k4 = jax.random.split(key, 4)
    bound1 = 1.0 / jnp.sqrt(10.0)
    bound2 = 1.0 / jnp.sqrt(5.0)
    w1 = jax.random.uniform(k1, (5, 10), jnp.float32, -bound1, bound1)
    b1 = jax.random.uniform(k2, (5, 1), jnp.float32, -bound1, bound1)
    w2 = jax.random.uniform(k3, (2, 5), jnp.float32, -bound2, bound2)
    b2 = jax.random.uniform(k4, (2, 1), jnp.float32, -bound2, bound2)
    return w1, b1, w2, b2


if __name__ == "__main__":
    key = jax.random.PRNGKey(0)
    k_params, k_x, k_x2 = jax.random.split(key, 3)
    w1, b1, w2, b2 = _init_params(k_params)

    # 1) Small batch, PyTorch layout, Pallas path forced (single full-dim tile).
    x = jax.random.normal(k_x, (8, 10), jnp.float32)
    ref = _mlp_reference(x, w1, b1, w2, b2)
    out = jax.block_until_ready(
        simple_model_forward(x, w1, b1, w2, b2, force_pallas=True))
    assert out.shape == (8, 2)
    assert jnp.allclose(out, ref, atol=1e-5, rtol=1e-5)

    # 2) Feature-major fast path directly (no boundary transposes).
    out_fm = jax.block_until_ready(simple_model_forward_fm(x.T, w1, b1, w2, b2))
    assert out_fm.shape == (2, 8)
    assert jnp.allclose(out_fm.T, ref, atol=1e-5, rtol=1e-5)

    # 3) Ragged batch exercising the cdiv grid + masked tail block
    #    (tile_b=128, B=300 -> 3 grid steps, last block 44/128 lanes valid).
    x2 = jax.random.normal(k_x2, (300, 10), jnp.float32)
    ref2 = _mlp_reference(x2, w1, b1, w2, b2)
    out2 = jax.block_until_ready(
        simple_model_forward(x2, w1, b1, w2, b2, force_pallas=True, tile_b=128))
    assert out2.shape == (300, 2)
    assert jnp.allclose(out2, ref2, atol=1e-5, rtol=1e-5)

    # 4) Small batch via the default dispatch (plain-XLA fallback).
    out_fb = jax.block_until_ready(simple_model_forward(x, w1, b1, w2, b2))
    assert jnp.allclose(out_fb, ref, atol=1e-5, rtol=1e-5)

    print("KERNEL_OK")
</pallas_src>

<mosaic_0001>
module attributes {stable_mosaic.version = 11 : i64} {
  func.func @_mlp_fm_kernel(%arg0: i32, %arg1: memref<10x8xf32, #tpu.memory_space<vmem>>, %arg2: memref<5x10xf32, #tpu.memory_space<vmem>>, %arg3: memref<5x1xf32, #tpu.memory_space<vmem>>, %arg4: memref<2x5xf32, #tpu.memory_space<vmem>>, %arg5: memref<2x1xf32, #tpu.memory_space<vmem>>, %arg6: memref<2x8xf32, #tpu.memory_space<vmem>>) attributes {dimension_semantics = [#tpu.dimension_semantics<parallel>], iteration_bounds = array<i64: 1>, scalar_prefetch = 0 : i64, scratch_operands = 0 : i64, tpu.core_type = #tpu.core_type<tc>, window_params = [{transform_indices = @transform_0, window_bounds = array<i64: 10, 8>}, {pipeline_mode = #tpu.pipeline_mode<synchronous>, transform_indices = @transform_1, window_bounds = array<i64: 5, 10>}, {pipeline_mode = #tpu.pipeline_mode<synchronous>, transform_indices = @transform_2, window_bounds = array<i64: 5, 1>}, {pipeline_mode = #tpu.pipeline_mode<synchronous>, transform_indices = @transform_3, window_bounds = array<i64: 2, 5>}, {pipeline_mode = #tpu.pipeline_mode<synchronous>, transform_indices = @transform_4, window_bounds = array<i64: 2, 1>}, {transform_indices = @transform_5, window_bounds = array<i64: 2, 8>}]} {
    %c0 = arith.constant 0 : index
    %c0_0 = arith.constant 0 : index
    %0 = vector.load %arg2[%c0, %c0_0] : memref<5x10xf32, #tpu.memory_space<vmem>>, vector<5x10xf32>
    %c0_1 = arith.constant 0 : index
    %c0_2 = arith.constant 0 : index
    %1 = vector.load %arg1[%c0_1, %c0_2] : memref<10x8xf32, #tpu.memory_space<vmem>>, vector<10x8xf32>
    %cst = arith.constant dense<0.000000e+00> : vector<5x8xf32>
    %2 = tpu.matmul %0, %1, %cst {dimension_numbers = #tpu.dot_dimension_numbers<[1], [0], [0], [1], [0, 0, 1, 1], [], []>} : vector<5x10xf32>, vector<10x8xf32>, vector<5x8xf32> -> vector<5x8xf32>
    %c0_3 = arith.constant 0 : index
    %c0_4 = arith.constant 0 : index
    %3 = vector.load %arg3[%c0_3, %c0_4] : memref<5x1xf32, #tpu.memory_space<vmem>>, vector<5x1xf32>
    %4 = vector.broadcast %3 : vector<5x1xf32> to vector<5x8xf32>
    %5 = arith.addf %2, %4 : vector<5x8xf32>
    %cst_5 = arith.constant 0.000000e+00 : f32
    %6 = vector.broadcast %cst_5 : f32 to vector<5x8xf32>
    %7 = arith.maximumf %5, %6 : vector<5x8xf32>
    %c0_6 = arith.constant 0 : index
    %c0_7 = arith.constant 0 : index
    %8 = vector.load %arg4[%c0_6, %c0_7] : memref<2x5xf32, #tpu.memory_space<vmem>>, vector<2x5xf32>
    %cst_8 = arith.constant dense<0.000000e+00> : vector<2x8xf32>
    %9 = tpu.matmul %8, %7, %cst_8 {dimension_numbers = #tpu.dot_dimension_numbers<[1], [0], [0], [1], [0, 0, 1, 1], [], []>} : vector<2x5xf32>, vector<5x8xf32>, vector<2x8xf32> -> vector<2x8xf32>
    %c0_9 = arith.constant 0 : index
    %c0_10 = arith.constant 0 : index
    %10 = vector.load %arg5[%c0_9, %c0_10] : memref<2x1xf32, #tpu.memory_space<vmem>>, vector<2x1xf32>
    %11 = vector.broadcast %10 : vector<2x1xf32> to vector<2x8xf32>
    %12 = arith.addf %9, %11 : vector<2x8xf32>
    %c0_11 = arith.constant 0 : index
    %c0_12 = arith.constant 0 : index
    %13 = vector.load %arg6[%c0_11, %c0_12] : memref<2x8xf32, #tpu.memory_space<vmem>>, vector<2x8xf32>
    tpu.vector_store %arg6[%c0_11, %c0_12], %12 {strides = array<i32>} : memref<2x8xf32, #tpu.memory_space<vmem>>, vector<2x8xf32>,
    return
  }
  func.func @transform_0(%arg0: i32) -> (i32, i32) {
    %c0_i32 = arith.constant 0 : i32
    %c0_i32_0 = arith.constant 0 : i32
    return %c0_i32, %arg0 : i32, i32
  }
  func.func @transform_1(%arg0: i32) -> (i32, i32) {
    %c0_i32 = arith.constant 0 : i32
    %c0_i32_0 = arith.constant 0 : i32
    %c0_i32_1 = arith.constant 0 : i32
    return %c0_i32, %c0_i32_0 : i32, i32
  }
  func.func @transform_2(%arg0: i32) -> (i32, i32) {
    %c0_i32 = arith.constant 0 : i32
    %c0_i32_0 = arith.constant 0 : i32
    %c0_i32_1 = arith.constant 0 : i32
    return %c0_i32, %c0_i32_0 : i32, i32
  }
  func.func @transform_3(%arg0: i32) -> (i32, i32) {
    %c0_i32 = arith.constant 0 : i32
    %c0_i32_0 = arith.constant 0 : i32
    %c0_i32_1 = arith.constant 0 : i32
    return %c0_i32, %c0_i32_0 : i32, i32
  }
  func.func @transform_4(%arg0: i32) -> (i32, i32) {
    %c0_i32 = arith.constant 0 : i32
    %c0_i32_0 = arith.constant 0 : i32
    %c0_i32_1 = arith.constant 0 : i32
    return %c0_i32, %c0_i32_0 : i32, i32
  }
  func.func @transform_5(%arg0: i32) -> (i32, i32) {
    %c0_i32 = arith.constant 0 : i32
    %c0_i32_0 = arith.constant 0 : i32
    return %c0_i32, %arg0 : i32, i32
  }
}

</mosaic_0001>

<llo_original>
// kernel: simple_model_forward_fm.1
$region0: #{simple_model_forward_fm.1}
  #allocation0 [shape = 'u32[]', space=smem, size = 0x4, offset = 0x4, fixed_abs, tag = 'smem constant byte address 0x4 - core index']
  #allocation1 [shape = 'u32[144,128]{1,0:T(1,128)}', space=vmem, size = 0x12000, scoped, tag = 'internal scratch']
  %s0 = inlined_call_operand.vmem [shape: f32[10,8], index: 0, kind: input, shape index: {}]
  %s1 = inlined_call_operand.vmem [shape: f32[5,10], index: 1, kind: input, shape index: {}]
  %s2 = inlined_call_operand.vmem [shape: f32[5,1], index: 2, kind: input, shape index: {}]
  %s3 = inlined_call_operand.vmem [shape: f32[2,5], index: 3, kind: input, shape index: {}]
  %s4 = inlined_call_operand.vmem [shape: f32[2,1], index: 4, kind: input, shape index: {}]
  %s5 = inlined_call_operand.hbm [shape: f32[2,8], index: 5, kind: output, shape index: {}]
  %s6 = sld [smem:[#allocation0]]
  $region30: #{simple_model_forward_fm.1} parent=0
    _
  %s8 = ssub.s32 1, %s6
  %s9 = scalar_select 0, %s8, %s6
  $region1: #{simple_model_forward_fm.1} parent=0
    #allocation2 [shape = 'u8[1024]{0}', space=vmem, size = 0x400, scoped, tag = 'output window, operand 0, single buffered']
    #allocation3 [shape = 's32[1]{0}', space=sflag, size = 0x4, scoped, tag = 'scoped memory for simple_model_forward_fm.1']
    %10 = vsyncpa [#allocation3], 0
    // Predicated region
    $region2: #{simple_model_forward_fm.1} parent=1 // pred_check
      _
    $region3: #{simple_model_forward_fm.1} parent=1 // pred_check_branch
      %12 = sbr.rel (0) target = $region5
    $region4: #{simple_model_forward_fm.1} parent=1 // pred_region
      _
    $region5: #{simple_model_forward_fm.1} parent=1 // pred_fallthru
      _
    // Predicated region
    $region6: #{simple_model_forward_fm.1} parent=1 // pred_check
      _
    $region7: #{simple_model_forward_fm.1} parent=1 // pred_check_branch
      %14 = sbr.rel (0) target = $region9
    $region8: #{simple_model_forward_fm.1} parent=1 // pred_region
      _
    $region9: #{simple_model_forward_fm.1} parent=1 // pred_fallthru
      _
    // Predicated region
    $region10: #{simple_model_forward_fm.1} parent=1 // pred_check
      _
    $region11: #{simple_model_forward_fm.1} parent=1 // pred_check_branch
      %16 = sbr.rel (0) target = $region13
    $region12: #{simple_model_forward_fm.1} parent=1 // pred_region
      _
    $region13: #{simple_model_forward_fm.1} parent=1 // pred_fallthru
      _
    // Predicated region
    $region14: #{simple_model_forward_fm.1} parent=1 // pred_check
      _
    $region15: #{simple_model_forward_fm.1} parent=1 // pred_check_branch
      %18 = sbr.rel (0) target = $region17
    $region16: #{simple_model_forward_fm.1} parent=1 // pred_region
      _
    $region17: #{simple_model_forward_fm.1} parent=1 // pred_fallthru
      _
    // Predicated region
    $region18: #{simple_model_forward_fm.1} parent=1 // pred_check
      _
    $region19: #{simple_model_forward_fm.1} parent=1 // pred_check_branch
      %20 = sbr.rel (0) target = $region21
    $region20: #{simple_model_forward_fm.1} parent=1 // pred_region
      _
    $region21: #{simple_model_forward_fm.1} parent=1 // pred_fallthru
      _
    %v21 = vld [vmem:[%s1] sm:$0x1f]
    %v22 = vld [vmem:[%s0] sm:$0xff]
    %v23 = vld [vmem:[%s0 + $0x8] sm:$0x3]
    %v24 = vld [vmem:[%s2] sm:$0x1f]
    %26 = vset.pattern.permute.xlu0 0
    %27 = vperm.xlu0 %26, %v24
    %v28 = vpop.permute.xlu0 %27
    %vm30 = vcmask 80896
    %v32 = vsel %vm30, %v21, 0
    %vm34 = vcmask 1041408
    %v36 = vsel %vm34, %v23, 0
    %38 = vmatprep.subr.mxu0 0.0
    %39 = vmatpush1.msra.mxu0 %v22
    %40 = vmatprep.subr.mxu0 0.0
    %41 = vmatpush1.msra.mxu0 %v36
    %42 = vmatprep.subr.mxu0 0.0
    %43 = vmatpush1.msra.mxu0 0.0
    %44 = vmatprep.subr.mxu0 0.0
    %45 = vmatpush1.msra.mxu0 0.0
    %46 = vmatprep.subr.mxu0 0.0
    %47 = vmatpush1.msra.mxu0 0.0
    %48 = vmatprep.subr.mxu0 0.0
    %49 = vmatpush1.msra.mxu0 0.0
    %50 = vmatprep.subr.mxu0 0.0
    %51 = vmatpush1.msra.mxu0 0.0
    %52 = vmatprep.subr.mxu0 0.0
    %53 = vmatpush1.msra.mxu0 0.0
    %54 = vmatprep.subr.mxu0 0.0
    %55 = vmatpush1.msra.mxu0 0.0
    %56 = vmatprep.subr.mxu0 0.0
    %57 = vmatpush1.msra.mxu0 0.0
    %58 = vmatprep.subr.mxu0 0.0
    %59 = vmatpush1.msra.mxu0 0.0
    %60 = vmatprep.subr.mxu0 0.0
    %61 = vmatpush1.msra.mxu0 0.0
    %62 = vmatprep.subr.mxu0 0.0
    %63 = vmatpush1.msra.mxu0 0.0
    %64 = vmatprep.subr.mxu0 0.0
    %65 = vmatpush1.msra.mxu0 0.0
    %66 = vmatprep.subr.mxu0 0.0
    %67 = vmatpush1.msra.mxu0 0.0
    %68 = vmatprep.subr.mxu0 0.0
    %69 = vmatpush1.msra.mxu0 0.0
    %70 = vmatprep.subr.mxu0 0.0
    %71 = vmatpush1.msra.mxu0 0.0
    %72 = vmatprep.subr.mxu0 0.0
    %73 = vmatpush1.msra.mxu0 0.0
    %74 = vmatprep.subr.mxu0 0.0
    %75 = vmatpush1.msra.mxu0 0.0
    %76 = vmatprep.subr.mxu0 0.0
    %77 = vmatpush1.msra.mxu0 0.0
    %78 = vmatprep.subr.mxu0 0.0
    %79 = vmatpush1.msra.mxu0 0.0
    %80 = vmatprep.subr.mxu0 0.0
    %81 = vmatpush1.msra.mxu0 0.0
    %82 = vmatprep.subr.mxu0 0.0
    %83 = vmatpush1.msra.mxu0 0.0
    %84 = vmatprep.subr.mxu0 0.0
    %85 = vmatpush1.msra.mxu0 0.0
    %86 = vmatprep.subr.mxu0 0.0
    %87 = vmatpush1.msra.mxu0 0.0
    %88 = vmatprep.subr.mxu0 0.0
    %89 = vmatpush1.msra.mxu0 0.0
    %90 = vmatprep.subr.mxu0 0.0
    %91 = vmatpush1.msra.mxu0 0.0
    %92 = vmatprep.subr.mxu0 0.0
    %93 = vmatpush1.msra.mxu0 0.0
    %94 = vmatprep.subr.mxu0 0.0
    %95 = vmatpush1.msra.mxu0 0.0
    %96 = vmatprep.subr.mxu0 0.0
    %97 = vmatpush1.msra.mxu0 0.0
    %98 = vmatprep.subr.mxu0 0.0
    %99 = vmatpush1.msra.mxu0 0.0
    %100 = vmatprep.subr.mxu0 0.0
    %101 = vmatpush1.msra.mxu0 0.0
    %102 = vmatprep.mubr.f32.mxu0 0.0
    %103 = vmatmul.mubr.f32.gmra.mrb[0].mxu0 %v32
    %v104 = vpop.f32.mrb[0].mxu0
    %v105 = vadd.f32 %v28, %v104
    %v106 = vpop.f32.mrb[0].mxu0
    %107 = vdwg.mxu0
    %v108 = vmax.f32 %v105, 0.0
    %v109 = vld [vmem:[%s3] sm:$0x3]
    %v110 = vld [vmem:[%s4] sm:$0x3]
    %112 = vset.pattern.permute.xlu0 0
    %113 = vperm.xlu0 %112, %v110
    %v114 = vpop.permute.xlu0 %113
    %vm116 = vcmask 39936
    %v118 = vsel %vm116, %v109, 0
    %vm120 = vcmask 1044480
    %v122 = vsel %vm120, %v108, 0
    %124 = vmatprep.subr.mxu0 0.0
    %125 = vmatpush1.msra.mxu0 %v122
    %126 = vmatprep.subr.mxu0 0.0
    %127 = vmatpush1.msra.mxu0 0.0
    %128 = vmatprep.subr.mxu0 0.0
    %129 = vmatpush1.msra.mxu0 0.0
    %130 = vmatprep.subr.mxu0 0.0
    %131 = vmatpush1.msra.mxu0 0.0
    %132 = vmatprep.subr.mxu0 0.0
    %133 = vmatpush1.msra.mxu0 0.0
    %134 = vmatprep.subr.mxu0 0.0
    %135 = vmatpush1.msra.mxu0 0.0
    %136 = vmatprep.subr.mxu0 0.0
    %137 = vmatpush1.msra.mxu0 0.0
    %138 = vmatprep.subr.mxu0 0.0
    %139 = vmatpush1.msra.mxu0 0.0
    %140 = vmatprep.subr.mxu0 0.0
    %141 = vmatpush1.msra.mxu0 0.0
    %142 = vmatprep.subr.mxu0 0.0
    %143 = vmatpush1.msra.mxu0 0.0
    %144 = vmatprep.subr.mxu0 0.0
    %145 = vmatpush1.msra.mxu0 0.0
    %146 = vmatprep.subr.mxu0 0.0
    %147 = vmatpush1.msra.mxu0 0.0
    %148 = vmatprep.subr.mxu0 0.0
    %149 = vmatpush1.msra.mxu0 0.0
    %150 = vmatprep.subr.mxu0 0.0
    %151 = vmatpush1.msra.mxu0 0.0
    %152 = vmatprep.subr.mxu0 0.0
    %153 = vmatpush1.msra.mxu0 0.0
    %154 = vmatprep.subr.mxu0 0.0
    %155 = vmatpush1.msra.mxu0 0.0
    %156 = vmatprep.subr.mxu0 0.0
    %157 = vmatpush1.msra.mxu0 0.0
    %158 = vmatprep.subr.mxu0 0.0
    %159 = vmatpush1.msra.mxu0 0.0
    %160 = vmatprep.subr.mxu0 0.0
    %161 = vmatpush1.msra.mxu0 0.0
    %162 = vmatprep.subr.mxu0 0.0
    %163 = vmatpush1.msra.mxu0 0.0
    %164 = vmatprep.subr.mxu0 0.0
    %165 = vmatpush1.msra.mxu0 0.0
    %166 = vmatprep.subr.mxu0 0.0
    %167 = vmatpush1.msra.mxu0 0.0
    %168 = vmatprep.subr.mxu0 0.0
    %169 = vmatpush1.msra.mxu0 0.0
    %170 = vmatprep.subr.mxu0 0.0
    %171 = vmatpush1.msra.mxu0 0.0
    %172 = vmatprep.subr.mxu0 0.0
    %173 = vmatpush1.msra.mxu0 0.0
    %174 = vmatprep.subr.mxu0 0.0
    %175 = vmatpush1.msra.mxu0 0.0
    %176 = vmatprep.subr.mxu0 0.0
    %177 = vmatpush1.msra.mxu0 0.0
    %178 = vmatprep.subr.mxu0 0.0
    %179 = vmatpush1.msra.mxu0 0.0
    %180 = vmatprep.subr.mxu0 0.0
    %181 = vmatpush1.msra.mxu0 0.0
    %182 = vmatprep.subr.mxu0 0.0
    %183 = vmatpush1.msra.mxu0 0.0
    %184 = vmatprep.subr.mxu0 0.0
    %185 = vmatpush1.msra.mxu0 0.0
    %186 = vmatprep.subr.mxu0 0.0
    %187 = vmatpush1.msra.mxu0 0.0
    %188 = vmatprep.mubr.f32.mxu0 0.0
    %189 = vmatmul.mubr.f32.gmra.mrb[0].mxu0 %v118
    %v190 = vpop.f32.mrb[0].mxu0
    %v191 = vadd.f32 %v114, %v190
    %v192 = vpop.f32.mrb[0].mxu0
    %193 = vdwg.mxu0
    %vm194 = vcmask 58368
    %195 = vst.msk [vmem:[#allocation2] sm:$0x3] %vm194, %v191
    // Predicated region
    $region22: #{simple_model_forward_fm.1} parent=1 // pred_check
      _
    $region23: #{simple_model_forward_fm.1} parent=1 // pred_check_branch
      %197 = sbr.rel (0) target = $region25
    $region24: #{simple_model_forward_fm.1} parent=1 // pred_region
      %s199 = ssub.s32 32, 32
      %200 = vsyncadd [#allocation3], %s199
      %s202 = sshll.u32 [#allocation2], 4
      %s203 = int_to_ptr.vmem [resolvable:$true] %s202
      %205 = dma.vmem_to_hbm [thread:$0]  %s203, 32, %s5, [#allocation3]
    $region25: #{simple_model_forward_fm.1} parent=1 // pred_fallthru
      _
    // Predicated region
    $region26: #{simple_model_forward_fm.1} parent=1 // pred_check
      _
    $region27: #{simple_model_forward_fm.1} parent=1 // pred_check_branch
      %207 = sbr.rel (0) target = $region29
    $region28: #{simple_model_forward_fm.1} parent=1 // pred_region
      %208 = dma.done [#allocation3], 32
    $region29: #{simple_model_forward_fm.1} parent=1 // pred_fallthru
      _
    %209 = vsyncpa [#allocation3], 1

</llo_original>
